<compile_context>
chip_gen: v7x
topology: tpu7x:2x2x1
jax: 0.10.0
libtpu: 0.0.40
codegen_flags: <defaults>
</compile_context>

<pallas_src>
import functools

import jax
import jax.numpy as jnp
from jax import lax
from jax.experimental import pallas as pl
from jax.experimental.pallas import tpu as pltpu


def _ceil_to(x, m):
    return (x + m - 1) // m * m


def _reorder_gates(w, H, axis=-1):
    """Torch gate order [i, f, g, o] -> [i, f, o, g] along `axis` (length 4H)."""
    i, f, g, o = jnp.split(w, 4, axis=axis)
    return jnp.concatenate([i, f, o, g], axis=axis)


def _lstm_recurrence_kernel(gx_ref, whh_ref, h0_ref, c0_ref, rec_ref,
                            h_scr, c_scr, *, hidden, tc, use_bf16):
    """One grid step == one batch tile x one chunk of `tc` LSTM time steps.

    gx_ref : (tc, Bt, 4H)  precomputed x_t @ W_ih + b (time-major, batch-padded),
                           gate order [i, f, o, g]
    whh_ref: (H, 4H)       recurrent weight (pre-transposed), gate order [i, f, o, g]
    h0/c0  : (Bt, H)       initial state
    rec_ref: (tc, Bt, H)   hidden states h_t for this chunk
    h_scr/c_scr: (Bt, H)   recurrent state carried across time chunks (VMEM scratch)
    """
    H = hidden

    # (Re-)initialize the recurrent state at the first time chunk of each batch tile.
    @pl.when(pl.program_id(1) == 0)
    def _():
        h_scr[...] = h0_ref[...]
        c_scr[...] = c0_ref[...]

    w_hh = whh_ref[...]  # hoist weight load out of the time loop

    def step(i, carry):
        h, c = carry
        # Only the state-dependent matmul remains on the serial critical path.
        h_op = h.astype(jnp.bfloat16) if use_bf16 else h
        gates = gx_ref[i] + jnp.dot(h_op, w_hh, preferred_element_type=jnp.float32)
        # Lane-contiguous nonlinearities: one sigmoid slab (i|f|o), one tanh slab (g).
        sig = jax.nn.sigmoid(gates[:, : 3 * H])
        g_g = jnp.tanh(gates[:, 3 * H:])
        i_g = sig[:, 0 * H:1 * H]
        f_g = sig[:, 1 * H:2 * H]
        o_g = sig[:, 2 * H:3 * H]
        c_new = f_g * c + i_g * g_g
        h_new = o_g * jnp.tanh(c_new)
        rec_ref[i] = h_new.astype(rec_ref.dtype)
        return (h_new, c_new)

    # Unrolled in-kernel time loop: state stays in vregs across steps of a chunk.
    h, c = lax.fori_loop(0, tc, step, (h_scr[...], c_scr[...]), unroll=True)
    h_scr[...] = h
    c_scr[...] = c


def _vmem_bytes(tc, Bt, H, whh_itemsize):
    """Rough double-buffered VMEM footprint estimate (lane/sublane padded)."""
    lane4h = _ceil_to(4 * H, 128)
    laneh = _ceil_to(H, 128)
    sub_bt = _ceil_to(Bt, 8)
    gx = 2 * tc * sub_bt * lane4h * 4            # gates_x input double-buffer
    rec = 2 * tc * sub_bt * laneh * 4            # rec output double-buffer
    whh = 2 * _ceil_to(H, 8) * lane4h * whh_itemsize
    state_in = 2 * 2 * sub_bt * laneh * 4        # h0, c0
    scratch = 2 * sub_bt * laneh * 4             # h/c scratch
    return gx + rec + whh + state_in + scratch


def lstm_generator_forward(noise_stock, dt, mean, std, params, *,
                           time_chunk=64, batch_tiles=1, use_bf16_matmul=False):
    """noise_stock: (B, T, dim_latent), dt: (B, T, 1), mean/std: python scalars.

    batch_tiles: set to 2 on v7x when the padded batch is >= 16 to shard the
      (parallel) batch axis across both TensorCores; leave 1 on v5e/v6e.
    use_bf16_matmul: cast the recurrent MXU operands to bf16 (f32 accumulation).
      Off by default so the f32 tolerance check below passes exactly.
    """
    B, T, dim_latent = noise_stock.shape
    H = params["w_hh"].shape[0]
    dim_out = params["w_lin"].shape[1]
    d_in = dim_latent + 1

    # Pad batch to a sublane multiple (>= 8); padded rows are sliced off afterwards.
    Bp = max(8, _ceil_to(B, 8))
    if Bp % batch_tiles != 0 or (Bp // batch_tiles) % 8 != 0:
        batch_tiles = 1
    Bt = Bp // batch_tiles

    whh_itemsize = 2 if use_bf16_matmul else 4

    # VMEM-aware time chunk; then pad T up to a multiple of it (no divisor search).
    vmem_budget = 40 << 20
    tc = max(1, min(time_chunk, T))
    while tc > 8 and _vmem_bytes(tc, Bt, H, whh_itemsize) > vmem_budget:
        tc = max(8, (tc + 1) // 2)
    Tp = _ceil_to(T, tc)

    # ----- wrapper glue (plain JAX) on the SMALL d_in-wide tensor -----
    z = jnp.concatenate([noise_stock, dt], axis=2).astype(jnp.float32)   # (B, T, d_in)
    z_tm = jnp.transpose(z, (1, 0, 2))                                   # (T, B, d_in)
    z_tm = jnp.pad(z_tm, ((0, Tp - T), (0, Bp - B), (0, 0)))             # (Tp, Bp, d_in)

    # Hoisted input projection, gate order reordered to [i, f, o, g].
    w_ih = _reorder_gates(params["w_ih"].astype(jnp.float32), H)          # (d_in, 4H)
    b_gate = _reorder_gates(
        (params["b_ih"] + params["b_hh"]).astype(jnp.float32), H)         # (4H,)
    gx = z_tm.reshape(Tp * Bp, d_in) @ w_ih + b_gate
    gx = gx.reshape(Tp, Bp, 4 * H)                                        # (Tp, Bp, 4H)

    w_hh = _reorder_gates(params["w_hh"].astype(jnp.float32), H)          # (H, 4H)
    if use_bf16_matmul:
        w_hh = w_hh.astype(jnp.bfloat16)

    h0 = jnp.broadcast_to(params["h_0"].astype(jnp.float32), (Bp, H))
    c0 = jnp.broadcast_to(params["c_0"].astype(jnp.float32), (Bp, H))

    kernel = functools.partial(_lstm_recurrence_kernel, hidden=H, tc=tc,
                               use_bf16=use_bf16_matmul)

    vmem_limit = int(min(64 << 20,
                         max(32 << 20,
                             int(1.5 * _vmem_bytes(tc, Bt, H, whh_itemsize)) + (4 << 20))))

    rec_tm = pl.pallas_call(
        kernel,
        out_shape=jax.ShapeDtypeStruct((Tp, Bp, H), jnp.float32),
        grid_spec=pltpu.PrefetchScalarGridSpec(
            num_scalar_prefetch=0,
            grid=(batch_tiles, Tp // tc),     # (parallel batch tiles, sequential time)
            in_specs=[
                pl.BlockSpec((tc, Bt, 4 * H), lambda b, t: (t, b, 0)),   # gates_x chunk
                pl.BlockSpec((H, 4 * H), lambda b, t: (0, 0)),           # W_hh^T
                pl.BlockSpec((Bt, H), lambda b, t: (b, 0)),              # h_0
                pl.BlockSpec((Bt, H), lambda b, t: (b, 0)),              # c_0
            ],
            out_specs=pl.BlockSpec((tc, Bt, H), lambda b, t: (t, b, 0)),
            scratch_shapes=[
                pltpu.VMEM((Bt, H), jnp.float32),   # h state (persists across chunks)
                pltpu.VMEM((Bt, H), jnp.float32),   # c state
            ],
        ),
        compiler_params=pltpu.CompilerParams(
            dimension_semantics=("parallel", "arbitrary"),
            vmem_limit_bytes=vmem_limit,
        ),
    )(gx, w_hh, h0, c0)

    # ----- epilogue: time-major lane-dense Linear, mean/std folded into the bias -----
    #   cat([rec, mean, std]) @ W_lin + b == rec @ W_lin[:H] + (b + mean*W[H] + std*W[H+1])
    w_lin = params["w_lin"].astype(jnp.float32)
    b_eff = (params["b_lin"].astype(jnp.float32)
             + mean * w_lin[H] + std * w_lin[H + 1])
    out_tm = rec_tm.reshape(Tp * Bp, H) @ w_lin[:H] + b_eff               # (Tp*Bp, dim_out)
    out_tm = out_tm.reshape(Tp, Bp, dim_out)
    # Only the tiny (T, B, dim_out) tensor is sliced + transposed.
    return jnp.transpose(out_tm[:T, :B, :], (1, 0, 2))                    # (B, T, dim_out)


def lstm_generator_ref(noise_stock, dt, mean, std, params):
    """Pure-JAX reference (mirrors torch.nn.LSTM + Linear, torch gate order i,f,g,o)."""
    z = jnp.concatenate([noise_stock, dt], axis=2).astype(jnp.float32)
    B, T, _ = z.shape
    H = params["w_hh"].shape[0]
    h = jnp.broadcast_to(params["h_0"], (B, H))
    c = jnp.broadcast_to(params["c_0"], (B, H))
    b = params["b_ih"] + params["b_hh"]

    def step(carry, x_t):
        h, c = carry
        gates = x_t @ params["w_ih"] + h @ params["w_hh"] + b
        i = jax.nn.sigmoid(gates[:, 0 * H:1 * H])
        f = jax.nn.sigmoid(gates[:, 1 * H:2 * H])
        g = jnp.tanh(gates[:, 2 * H:3 * H])
        o = jax.nn.sigmoid(gates[:, 3 * H:4 * H])
        c = f * c + i * g
        h = o * jnp.tanh(c)
        return (h, c), h

    (_, _), hs = jax.lax.scan(step, (h, c), jnp.transpose(z, (1, 0, 2)))
    rec = jnp.transpose(hs, (1, 0, 2))                           # (B, T, H)
    m = jnp.full((B, T, 1), mean, jnp.float32)
    s = jnp.full((B, T, 1), std, jnp.float32)
    feats = jnp.concatenate([rec, m, s], axis=2)
    return feats @ params["w_lin"] + params["b_lin"]


if __name__ == "__main__":
    # Small shapes consistent with the module's forward.
    B, T = 2, 8
    dim_latent, dim_hidden, dim_output = 4, 32, 3
    d_in = dim_latent + 1
    # TODO(synk): only num_layers=1 (the module's default) is implemented.

    key = jax.random.PRNGKey(0)
    ks = jax.random.split(key, 8)
    bound = 1.0 / jnp.sqrt(dim_hidden)
    params = {
        # LSTM weights stored pre-transposed: (in, 4H) / (H, 4H), torch gate order i,f,g,o.
        "w_ih": jax.random.uniform(ks[0], (d_in, 4 * dim_hidden), jnp.float32, -bound, bound),
        "w_hh": jax.random.uniform(ks[1], (dim_hidden, 4 * dim_hidden), jnp.float32, -bound, bound),
        "b_ih": jax.random.uniform(ks[2], (4 * dim_hidden,), jnp.float32, -bound, bound),
        "b_hh": jax.random.uniform(ks[3], (4 * dim_hidden,), jnp.float32, -bound, bound),
        # Linear on (H+2) features, stored as (H+2, dim_output).
        "w_lin": jax.random.uniform(ks[4], (dim_hidden + 2, dim_output), jnp.float32, -bound, bound),
        "b_lin": jax.random.uniform(ks[5], (dim_output,), jnp.float32, -bound, bound),
        # h_0 / c_0 are zero-initialized nn.Parameters in the module.
        "h_0": jnp.zeros((1, dim_hidden), jnp.float32),
        "c_0": jnp.zeros((1, dim_hidden), jnp.float32),
    }

    noise_stock = jax.random.normal(ks[6], (B, T, dim_latent), jnp.float32)
    dt = jax.random.uniform(ks[7], (B, T, 1), jnp.float32)
    mean, std = 0.1, 0.5

    out = lstm_generator_forward(noise_stock, dt, mean, std, params)
    out = jax.block_until_ready(out)

    ref = lstm_generator_ref(noise_stock, dt, mean, std, params)
    assert out.shape == (B, T, dim_output), out.shape
    assert jnp.allclose(out, ref, atol=1e-4, rtol=1e-4), float(jnp.max(jnp.abs(out - ref)))
    print("KERNEL_OK")
</pallas_src>

<mosaic_0001>
module attributes {stable_mosaic.version = 11 : i64} {
  func.func @_lstm_recurrence_kernel(%arg0: i32, %arg1: i32, %arg2: memref<8x8x128xf32, #tpu.memory_space<vmem>>, %arg3: memref<32x128xf32, #tpu.memory_space<vmem>>, %arg4: memref<8x32xf32, #tpu.memory_space<vmem>>, %arg5: memref<8x32xf32, #tpu.memory_space<vmem>>, %arg6: memref<8x8x32xf32, #tpu.memory_space<vmem>>, %arg7: memref<8x32xf32, #tpu.memory_space<vmem>>, %arg8: memref<8x32xf32, #tpu.memory_space<vmem>>) attributes {dimension_semantics = [#tpu.dimension_semantics<parallel>, #tpu.dimension_semantics<arbitrary>], iteration_bounds = array<i64: 1, 1>, scalar_prefetch = 0 : i64, scratch_operands = 2 : i64, tpu.core_type = #tpu.core_type<tc>, window_params = [{transform_indices = @transform_0, window_bounds = array<i64: 8, 8, 128>}, {pipeline_mode = #tpu.pipeline_mode<synchronous>, transform_indices = @transform_1, window_bounds = array<i64: 32, 128>}, {transform_indices = @transform_2, window_bounds = array<i64: 8, 32>}, {transform_indices = @transform_3, window_bounds = array<i64: 8, 32>}, {transform_indices = @transform_4, window_bounds = array<i64: 8, 8, 32>}]} {
    %c0_i32 = arith.constant 0 : i32
    %0 = arith.cmpi eq, %arg1, %c0_i32 : i32
    %1 = arith.extui %0 : i1 to i32
    %c0_i32_0 = arith.constant 0 : i32
    %2 = arith.cmpi ne, %1, %c0_i32_0 : i32
    scf.if %2 {
      %c0_58 = arith.constant 0 : index
      %c0_59 = arith.constant 0 : index
      %208 = vector.load %arg4[%c0_58, %c0_59] : memref<8x32xf32, #tpu.memory_space<vmem>>, vector<8x32xf32>
      %c0_60 = arith.constant 0 : index
      %c0_61 = arith.constant 0 : index
      %209 = vector.load %arg7[%c0_60, %c0_61] : memref<8x32xf32, #tpu.memory_space<vmem>>, vector<8x32xf32>
      tpu.vector_store %arg7[%c0_60, %c0_61], %208 {strides = array<i32>} : memref<8x32xf32, #tpu.memory_space<vmem>>, vector<8x32xf32>,
      %c0_62 = arith.constant 0 : index
      %c0_63 = arith.constant 0 : index
      %210 = vector.load %arg5[%c0_62, %c0_63] : memref<8x32xf32, #tpu.memory_space<vmem>>, vector<8x32xf32>
      %c0_64 = arith.constant 0 : index
      %c0_65 = arith.constant 0 : index
      %211 = vector.load %arg8[%c0_64, %c0_65] : memref<8x32xf32, #tpu.memory_space<vmem>>, vector<8x32xf32>
      tpu.vector_store %arg8[%c0_64, %c0_65], %210 {strides = array<i32>} : memref<8x32xf32, #tpu.memory_space<vmem>>, vector<8x32xf32>,
    } else {
    }
    %c0 = arith.constant 0 : index
    %c0_1 = arith.constant 0 : index
    %3 = vector.load %arg3[%c0, %c0_1] : memref<32x128xf32, #tpu.memory_space<vmem>>, vector<32x128xf32>
    %c0_2 = arith.constant 0 : index
    %c0_3 = arith.constant 0 : index
    %4 = vector.load %arg7[%c0_2, %c0_3] : memref<8x32xf32, #tpu.memory_space<vmem>>, vector<8x32xf32>
    %c0_4 = arith.constant 0 : index
    %c0_5 = arith.constant 0 : index
    %5 = vector.load %arg8[%c0_4, %c0_5] : memref<8x32xf32, #tpu.memory_space<vmem>>, vector<8x32xf32>
    %c0_i32_6 = arith.constant 0 : i32
    %6 = arith.index_cast %c0_i32_6 : i32 to index
    %c0_7 = arith.constant 0 : index
    %c0_8 = arith.constant 0 : index
    %7 = vector.load %arg2[%6, %c0_7, %c0_8] : memref<8x8x128xf32, #tpu.memory_space<vmem>>, vector<1x8x128xf32>
    %8 = vector.shape_cast %7 : vector<1x8x128xf32> to vector<8x128xf32>
    %cst = arith.constant dense<0.000000e+00> : vector<8x128xf32>
    %9 = tpu.matmul %4, %3, %cst {dimension_numbers = #tpu.dot_dimension_numbers<[1], [0], [0], [1], [0, 0, 1, 1], [], []>} : vector<8x32xf32>, vector<32x128xf32>, vector<8x128xf32> -> vector<8x128xf32>
    %10 = arith.addf %8, %9 : vector<8x128xf32>
    %11 = vector.extract_strided_slice %10 {offsets = [0, 0], sizes = [8, 96], strides = [1, 1]} : vector<8x128xf32> to vector<8x96xf32>
    %12 = arith.negf %11 : vector<8x96xf32>
    %13 = math.exp %12 : vector<8x96xf32>
    %cst_9 = arith.constant 1.000000e+00 : f32
    %14 = vector.broadcast %cst_9 : f32 to vector<8x96xf32>
    %15 = arith.addf %14, %13 : vector<8x96xf32>
    %16 = arith.divf %14, %15 : vector<8x96xf32>
    %17 = vector.extract_strided_slice %10 {offsets = [0, 96], sizes = [8, 32], strides = [1, 1]} : vector<8x128xf32> to vector<8x32xf32>
    %18 = math.tanh %17 : vector<8x32xf32>
    %19 = vector.extract_strided_slice %16 {offsets = [0, 0], sizes = [8, 32], strides = [1, 1]} : vector<8x96xf32> to vector<8x32xf32>
    %20 = vector.extract_strided_slice %16 {offsets = [0, 32], sizes = [8, 32], strides = [1, 1]} : vector<8x96xf32> to vector<8x32xf32>
    %21 = vector.extract_strided_slice %16 {offsets = [0, 64], sizes = [8, 32], strides = [1, 1]} : vector<8x96xf32> to vector<8x32xf32>
    %22 = arith.mulf %20, %5 : vector<8x32xf32>
    %23 = arith.mulf %19, %18 : vector<8x32xf32>
    %24 = arith.addf %22, %23 : vector<8x32xf32>
    %25 = math.tanh %24 : vector<8x32xf32>
    %26 = arith.mulf %21, %25 : vector<8x32xf32>
    %27 = arith.index_cast %c0_i32_6 : i32 to index
    %c0_10 = arith.constant 0 : index
    %c0_11 = arith.constant 0 : index
    %28 = vector.load %arg6[%27, %c0_10, %c0_11] : memref<8x8x32xf32, #tpu.memory_space<vmem>>, vector<1x8x32xf32>
    %29 = vector.shape_cast %28 : vector<1x8x32xf32> to vector<8x32xf32>
    %30 = vector.shape_cast %26 : vector<8x32xf32> to vector<1x8x32xf32>
    tpu.vector_store %arg6[%27, %c0_10, %c0_11], %30 {strides = array<i32>} : memref<8x8x32xf32, #tpu.memory_space<vmem>>, vector<1x8x32xf32>,
    %c1_i32 = arith.constant 1 : i32
    %31 = arith.index_cast %c1_i32 : i32 to index
    %c0_12 = arith.constant 0 : index
    %c0_13 = arith.constant 0 : index
    %32 = vector.load %arg2[%31, %c0_12, %c0_13] : memref<8x8x128xf32, #tpu.memory_space<vmem>>, vector<1x8x128xf32>
    %33 = vector.shape_cast %32 : vector<1x8x128xf32> to vector<8x128xf32>
    %cst_14 = arith.constant dense<0.000000e+00> : vector<8x128xf32>
    %34 = tpu.matmul %26, %3, %cst_14 {dimension_numbers = #tpu.dot_dimension_numbers<[1], [0], [0], [1], [0, 0, 1, 1], [], []>} : vector<8x32xf32>, vector<32x128xf32>, vector<8x128xf32> -> vector<8x128xf32>
    %35 = arith.addf %33, %34 : vector<8x128xf32>
    %36 = vector.extract_strided_slice %35 {offsets = [0, 0], sizes = [8, 96], strides = [1, 1]} : vector<8x128xf32> to vector<8x96xf32>
    %37 = arith.negf %36 : vector<8x96xf32>
    %38 = math.exp %37 : vector<8x96xf32>
    %cst_15 = arith.constant 1.000000e+00 : f32
    %39 = vector.broadcast %cst_15 : f32 to vector<8x96xf32>
    %40 = arith.addf %39, %38 : vector<8x96xf32>
    %41 = arith.divf %39, %40 : vector<8x96xf32>
    %42 = vector.extract_strided_slice %35 {offsets = [0, 96], sizes = [8, 32], strides = [1, 1]} : vector<8x128xf32> to vector<8x32xf32>
    %43 = math.tanh %42 : vector<8x32xf32>
    %44 = vector.extract_strided_slice %41 {offsets = [0, 0], sizes = [8, 32], strides = [1, 1]} : vector<8x96xf32> to vector<8x32xf32>
    %45 = vector.extract_strided_slice %41 {offsets = [0, 32], sizes = [8, 32], strides = [1, 1]} : vector<8x96xf32> to vector<8x32xf32>
    %46 = vector.extract_strided_slice %41 {offsets = [0, 64], sizes = [8, 32], strides = [1, 1]} : vector<8x96xf32> to vector<8x32xf32>
    %47 = arith.mulf %45, %24 : vector<8x32xf32>
    %48 = arith.mulf %44, %43 : vector<8x32xf32>
    %49 = arith.addf %47, %48 : vector<8x32xf32>
    %50 = math.tanh %49 : vector<8x32xf32>
    %51 = arith.mulf %46, %50 : vector<8x32xf32>
    %52 = arith.index_cast %c1_i32 : i32 to index
    %c0_16 = arith.constant 0 : index
    %c0_17 = arith.constant 0 : index
    %53 = vector.load %arg6[%52, %c0_16, %c0_17] : memref<8x8x32xf32, #tpu.memory_space<vmem>>, vector<1x8x32xf32>
    %54 = vector.shape_cast %53 : vector<1x8x32xf32> to vector<8x32xf32>
    %55 = vector.shape_cast %51 : vector<8x32xf32> to vector<1x8x32xf32>
    tpu.vector_store %arg6[%52, %c0_16, %c0_17], %55 {strides = array<i32>} : memref<8x8x32xf32, #tpu.memory_space<vmem>>, vector<1x8x32xf32>,
    %c2_i32 = arith.constant 2 : i32
    %56 = arith.index_cast %c2_i32 : i32 to index
    %c0_18 = arith.constant 0 : index
    %c0_19 = arith.constant 0 : index
    %57 = vector.load %arg2[%56, %c0_18, %c0_19] : memref<8x8x128xf32, #tpu.memory_space<vmem>>, vector<1x8x128xf32>
    %58 = vector.shape_cast %57 : vector<1x8x128xf32> to vector<8x128xf32>
    %cst_20 = arith.constant dense<0.000000e+00> : vector<8x128xf32>
    %59 = tpu.matmul %51, %3, %cst_20 {dimension_numbers = #tpu.dot_dimension_numbers<[1], [0], [0], [1], [0, 0, 1, 1], [], []>} : vector<8x32xf32>, vector<32x128xf32>, vector<8x128xf32> -> vector<8x128xf32>
    %60 = arith.addf %58, %59 : vector<8x128xf32>
    %61 = vector.extract_strided_slice %60 {offsets = [0, 0], sizes = [8, 96], strides = [1, 1]} : vector<8x128xf32> to vector<8x96xf32>
    %62 = arith.negf %61 : vector<8x96xf32>
    %63 = math.exp %62 : vector<8x96xf32>
    %cst_21 = arith.constant 1.000000e+00 : f32
    %64 = vector.broadcast %cst_21 : f32 to vector<8x96xf32>
    %65 = arith.addf %64, %63 : vector<8x96xf32>
    %66 = arith.divf %64, %65 : vector<8x96xf32>
    %67 = vector.extract_strided_slice %60 {offsets = [0, 96], sizes = [8, 32], strides = [1, 1]} : vector<8x128xf32> to vector<8x32xf32>
    %68 = math.tanh %67 : vector<8x32xf32>
    %69 = vector.extract_strided_slice %66 {offsets = [0, 0], sizes = [8, 32], strides = [1, 1]} : vector<8x96xf32> to vector<8x32xf32>
    %70 = vector.extract_strided_slice %66 {offsets = [0, 32], sizes = [8, 32], strides = [1, 1]} : vector<8x96xf32> to vector<8x32xf32>
    %71 = vector.extract_strided_slice %66 {offsets = [0, 64], sizes = [8, 32], strides = [1, 1]} : vector<8x96xf32> to vector<8x32xf32>
    %72 = arith.mulf %70, %49 : vector<8x32xf32>
    %73 = arith.mulf %69, %68 : vector<8x32xf32>
    %74 = arith.addf %72, %73 : vector<8x32xf32>
    %75 = math.tanh %74 : vector<8x32xf32>
    %76 = arith.mulf %71, %75 : vector<8x32xf32>
    %77 = arith.index_cast %c2_i32 : i32 to index
    %c0_22 = arith.constant 0 : index
    %c0_23 = arith.constant 0 : index
    %78 = vector.load %arg6[%77, %c0_22, %c0_23] : memref<8x8x32xf32, #tpu.memory_space<vmem>>, vector<1x8x32xf32>
    %79 = vector.shape_cast %78 : vector<1x8x32xf32> to vector<8x32xf32>
    %80 = vector.shape_cast %76 : vector<8x32xf32> to vector<1x8x32xf32>
    tpu.vector_store %arg6[%77, %c0_22, %c0_23], %80 {strides = array<i32>} : memref<8x8x32xf32, #tpu.memory_space<vmem>>, vector<1x8x32xf32>,
    %c3_i32 = arith.constant 3 : i32
    %81 = arith.index_cast %c3_i32 : i32 to index
    %c0_24 = arith.constant 0 : index
    %c0_25 = arith.constant 0 : index
    %82 = vector.load %arg2[%81, %c0_24, %c0_25] : memref<8x8x128xf32, #tpu.memory_space<vmem>>, vector<1x8x128xf32>
    %83 = vector.shape_cast %82 : vector<1x8x128xf32> to vector<8x128xf32>
    %cst_26 = arith.constant dense<0.000000e+00> : vector<8x128xf32>
    %84 = tpu.matmul %76, %3, %cst_26 {dimension_numbers = #tpu.dot_dimension_numbers<[1], [0], [0], [1], [0, 0, 1, 1], [], []>} : vector<8x32xf32>, vector<32x128xf32>, vector<8x128xf32> -> vector<8x128xf32>
    %85 = arith.addf %83, %84 : vector<8x128xf32>
    %86 = vector.extract_strided_slice %85 {offsets = [0, 0], sizes = [8, 96], strides = [1, 1]} : vector<8x128xf32> to vector<8x96xf32>
    %87 = arith.negf %86 : vector<8x96xf32>
    %88 = math.exp %87 : vector<8x96xf32>
    %cst_27 = arith.constant 1.000000e+00 : f32
    %89 = vector.broadcast %cst_27 : f32 to vector<8x96xf32>
    %90 = arith.addf %89, %88 : vector<8x96xf32>
    %91 = arith.divf %89, %90 : vector<8x96xf32>
    %92 = vector.extract_strided_slice %85 {offsets = [0, 96], sizes = [8, 32], strides = [1, 1]} : vector<8x128xf32> to vector<8x32xf32>
    %93 = math.tanh %92 : vector<8x32xf32>
    %94 = vector.extract_strided_slice %91 {offsets = [0, 0], sizes = [8, 32], strides = [1, 1]} : vector<8x96xf32> to vector<8x32xf32>
    %95 = vector.extract_strided_slice %91 {offsets = [0, 32], sizes = [8, 32], strides = [1, 1]} : vector<8x96xf32> to vector<8x32xf32>
    %96 = vector.extract_strided_slice %91 {offsets = [0, 64], sizes = [8, 32], strides = [1, 1]} : vector<8x96xf32> to vector<8x32xf32>
    %97 = arith.mulf %95, %74 : vector<8x32xf32>
    %98 = arith.mulf %94, %93 : vector<8x32xf32>
    %99 = arith.addf %97, %98 : vector<8x32xf32>
    %100 = math.tanh %99 : vector<8x32xf32>
    %101 = arith.mulf %96, %100 : vector<8x32xf32>
    %102 = arith.index_cast %c3_i32 : i32 to index
    %c0_28 = arith.constant 0 : index
    %c0_29 = arith.constant 0 : index
    %103 = vector.load %arg6[%102, %c0_28, %c0_29] : memref<8x8x32xf32, #tpu.memory_space<vmem>>, vector<1x8x32xf32>
    %104 = vector.shape_cast %103 : vector<1x8x32xf32> to vector<8x32xf32>
    %105 = vector.shape_cast %101 : vector<8x32xf32> to vector<1x8x32xf32>
    tpu.vector_store %arg6[%102, %c0_28, %c0_29], %105 {strides = array<i32>} : memref<8x8x32xf32, #tpu.memory_space<vmem>>, vector<1x8x32xf32>,
    %c4_i32 = arith.constant 4 : i32
    %106 = arith.index_cast %c4_i32 : i32 to index
    %c0_30 = arith.constant 0 : index
    %c0_31 = arith.constant 0 : index
    %107 = vector.load %arg2[%106, %c0_30, %c0_31] : memref<8x8x128xf32, #tpu.memory_space<vmem>>, vector<1x8x128xf32>
    %108 = vector.shape_cast %107 : vector<1x8x128xf32> to vector<8x128xf32>
    %cst_32 = arith.constant dense<0.000000e+00> : vector<8x128xf32>
    %109 = tpu.matmul %101, %3, %cst_32 {dimension_numbers = #tpu.dot_dimension_numbers<[1], [0], [0], [1], [0, 0, 1, 1], [], []>} : vector<8x32xf32>, vector<32x128xf32>, vector<8x128xf32> -> vector<8x128xf32>
    %110 = arith.addf %108, %109 : vector<8x128xf32>
    %111 = vector.extract_strided_slice %110 {offsets = [0, 0], sizes = [8, 96], strides = [1, 1]} : vector<8x128xf32> to vector<8x96xf32>
    %112 = arith.negf %111 : vector<8x96xf32>
    %113 = math.exp %112 : vector<8x96xf32>
    %cst_33 = arith.constant 1.000000e+00 : f32
    %114 = vector.broadcast %cst_33 : f32 to vector<8x96xf32>
    %115 = arith.addf %114, %113 : vector<8x96xf32>
    %116 = arith.divf %114, %115 : vector<8x96xf32>
    %117 = vector.extract_strided_slice %110 {offsets = [0, 96], sizes = [8, 32], strides = [1, 1]} : vector<8x128xf32> to vector<8x32xf32>
    %118 = math.tanh %117 : vector<8x32xf32>
    %119 = vector.extract_strided_slice %116 {offsets = [0, 0], sizes = [8, 32], strides = [1, 1]} : vector<8x96xf32> to vector<8x32xf32>
    %120 = vector.extract_strided_slice %116 {offsets = [0, 32], sizes = [8, 32], strides = [1, 1]} : vector<8x96xf32> to vector<8x32xf32>
    %121 = vector.extract_strided_slice %116 {offsets = [0, 64], sizes = [8, 32], strides = [1, 1]} : vector<8x96xf32> to vector<8x32xf32>
    %122 = arith.mulf %120, %99 : vector<8x32xf32>
    %123 = arith.mulf %119, %118 : vector<8x32xf32>
    %124 = arith.addf %122, %123 : vector<8x32xf32>
    %125 = math.tanh %124 : vector<8x32xf32>
    %126 = arith.mulf %121, %125 : vector<8x32xf32>
    %127 = arith.index_cast %c4_i32 : i32 to index
    %c0_34 = arith.constant 0 : index
    %c0_35 = arith.constant 0 : index
    %128 = vector.load %arg6[%127, %c0_34, %c0_35] : memref<8x8x32xf32, #tpu.memory_space<vmem>>, vector<1x8x32xf32>
    %129 = vector.shape_cast %128 : vector<1x8x32xf32> to vector<8x32xf32>
    %130 = vector.shape_cast %126 : vector<8x32xf32> to vector<1x8x32xf32>
    tpu.vector_store %arg6[%127, %c0_34, %c0_35], %130 {strides = array<i32>} : memref<8x8x32xf32, #tpu.memory_space<vmem>>, vector<1x8x32xf32>,
    %c5_i32 = arith.constant 5 : i32
    %131 = arith.index_cast %c5_i32 : i32 to index
    %c0_36 = arith.constant 0 : index
    %c0_37 = arith.constant 0 : index
    %132 = vector.load %arg2[%131, %c0_36, %c0_37] : memref<8x8x128xf32, #tpu.memory_space<vmem>>, vector<1x8x128xf32>
    %133 = vector.shape_cast %132 : vector<1x8x128xf32> to vector<8x128xf32>
    %cst_38 = arith.constant dense<0.000000e+00> : vector<8x128xf32>
    %134 = tpu.matmul %126, %3, %cst_38 {dimension_numbers = #tpu.dot_dimension_numbers<[1], [0], [0], [1], [0, 0, 1, 1], [], []>} : vector<8x32xf32>, vector<32x128xf32>, vector<8x128xf32> -> vector<8x128xf32>
    %135 = arith.addf %133, %134 : vector<8x128xf32>
    %136 = vector.extract_strided_slice %135 {offsets = [0, 0], sizes = [8, 96], strides = [1, 1]} : vector<8x128xf32> to vector<8x96xf32>
    %137 = arith.negf %136 : vector<8x96xf32>
    %138 = math.exp %137 : vector<8x96xf32>
    %cst_39 = arith.constant 1.000000e+00 : f32
    %139 = vector.broadcast %cst_39 : f32 to vector<8x96xf32>
    %140 = arith.addf %139, %138 : vector<8x96xf32>
    %141 = arith.divf %139, %140 : vector<8x96xf32>
    %142 = vector.extract_strided_slice %135 {offsets = [0, 96], sizes = [8, 32], strides = [1, 1]} : vector<8x128xf32> to vector<8x32xf32>
    %143 = math.tanh %142 : vector<8x32xf32>
    %144 = vector.extract_strided_slice %141 {offsets = [0, 0], sizes = [8, 32], strides = [1, 1]} : vector<8x96xf32> to vector<8x32xf32>
    %145 = vector.extract_strided_slice %141 {offsets = [0, 32], sizes = [8, 32], strides = [1, 1]} : vector<8x96xf32> to vector<8x32xf32>
    %146 = vector.extract_strided_slice %141 {offsets = [0, 64], sizes = [8, 32], strides = [1, 1]} : vector<8x96xf32> to vector<8x32xf32>
    %147 = arith.mulf %145, %124 : vector<8x32xf32>
    %148 = arith.mulf %144, %143 : vector<8x32xf32>
    %149 = arith.addf %147, %148 : vector<8x32xf32>
    %150 = math.tanh %149 : vector<8x32xf32>
    %151 = arith.mulf %146, %150 : vector<8x32xf32>
    %152 = arith.index_cast %c5_i32 : i32 to index
    %c0_40 = arith.constant 0 : index
    %c0_41 = arith.constant 0 : index
    %153 = vector.load %arg6[%152, %c0_40, %c0_41] : memref<8x8x32xf32, #tpu.memory_space<vmem>>, vector<1x8x32xf32>
    %154 = vector.shape_cast %153 : vector<1x8x32xf32> to vector<8x32xf32>
    %155 = vector.shape_cast %151 : vector<8x32xf32> to vector<1x8x32xf32>
    tpu.vector_store %arg6[%152, %c0_40, %c0_41], %155 {strides = array<i32>} : memref<8x8x32xf32, #tpu.memory_space<vmem>>, vector<1x8x32xf32>,
    %c6_i32 = arith.constant 6 : i32
    %156 = arith.index_cast %c6_i32 : i32 to index
    %c0_42 = arith.constant 0 : index
    %c0_43 = arith.constant 0 : index
    %157 = vector.load %arg2[%156, %c0_42, %c0_43] : memref<8x8x128xf32, #tpu.memory_space<vmem>>, vector<1x8x128xf32>
    %158 = vector.shape_cast %157 : vector<1x8x128xf32> to vector<8x128xf32>
    %cst_44 = arith.constant dense<0.000000e+00> : vector<8x128xf32>
    %159 = tpu.matmul %151, %3, %cst_44 {dimension_numbers = #tpu.dot_dimension_numbers<[1], [0], [0], [1], [0, 0, 1, 1], [], []>} : vector<8x32xf32>, vector<32x128xf32>, vector<8x128xf32> -> vector<8x128xf32>
    %160 = arith.addf %158, %159 : vector<8x128xf32>
    %161 = vector.extract_strided_slice %160 {offsets = [0, 0], sizes = [8, 96], strides = [1, 1]} : vector<8x128xf32> to vector<8x96xf32>
    %162 = arith.negf %161 : vector<8x96xf32>
    %163 = math.exp %162 : vector<8x96xf32>
    %cst_45 = arith.constant 1.000000e+00 : f32
    %164 = vector.broadcast %cst_45 : f32 to vector<8x96xf32>
    %165 = arith.addf %164, %163 : vector<8x96xf32>
    %166 = arith.divf %164, %165 : vector<8x96xf32>
    %167 = vector.extract_strided_slice %160 {offsets = [0, 96], sizes = [8, 32], strides = [1, 1]} : vector<8x128xf32> to vector<8x32xf32>
    %168 = math.tanh %167 : vector<8x32xf32>
    %169 = vector.extract_strided_slice %166 {offsets = [0, 0], sizes = [8, 32], strides = [1, 1]} : vector<8x96xf32> to vector<8x32xf32>
    %170 = vector.extract_strided_slice %166 {offsets = [0, 32], sizes = [8, 32], strides = [1, 1]} : vector<8x96xf32> to vector<8x32xf32>
    %171 = vector.extract_strided_slice %166 {offsets = [0, 64], sizes = [8, 32], strides = [1, 1]} : vector<8x96xf32> to vector<8x32xf32>
    %172 = arith.mulf %170, %149 : vector<8x32xf32>
    %173 = arith.mulf %169, %168 : vector<8x32xf32>
    %174 = arith.addf %172, %173 : vector<8x32xf32>
    %175 = math.tanh %174 : vector<8x32xf32>
    %176 = arith.mulf %171, %175 : vector<8x32xf32>
    %177 = arith.index_cast %c6_i32 : i32 to index
    %c0_46 = arith.constant 0 : index
    %c0_47 = arith.constant 0 : index
    %178 = vector.load %arg6[%177, %c0_46, %c0_47] : memref<8x8x32xf32, #tpu.memory_space<vmem>>, vector<1x8x32xf32>
    %179 = vector.shape_cast %178 : vector<1x8x32xf32> to vector<8x32xf32>
    %180 = vector.shape_cast %176 : vector<8x32xf32> to vector<1x8x32xf32>
    tpu.vector_store %arg6[%177, %c0_46, %c0_47], %180 {strides = array<i32>} : memref<8x8x32xf32, #tpu.memory_space<vmem>>, vector<1x8x32xf32>,
    %c7_i32 = arith.constant 7 : i32
    %181 = arith.index_cast %c7_i32 : i32 to index
    %c0_48 = arith.constant 0 : index
    %c0_49 = arith.constant 0 : index
    %182 = vector.load %arg2[%181, %c0_48, %c0_49] : memref<8x8x128xf32, #tpu.memory_space<vmem>>, vector<1x8x128xf32>
    %183 = vector.shape_cast %182 : vector<1x8x128xf32> to vector<8x128xf32>
    %cst_50 = arith.constant dense<0.000000e+00> : vector<8x128xf32>
    %184 = tpu.matmul %176, %3, %cst_50 {dimension_numbers = #tpu.dot_dimension_numbers<[1], [0], [0], [1], [0, 0, 1, 1], [], []>} : vector<8x32xf32>, vector<32x128xf32>, vector<8x128xf32> -> vector<8x128xf32>
    %185 = arith.addf %183, %184 : vector<8x128xf32>
    %186 = vector.extract_strided_slice %185 {offsets = [0, 0], sizes = [8, 96], strides = [1, 1]} : vector<8x128xf32> to vector<8x96xf32>
    %187 = arith.negf %186 : vector<8x96xf32>
    %188 = math.exp %187 : vector<8x96xf32>
    %cst_51 = arith.constant 1.000000e+00 : f32
    %189 = vector.broadcast %cst_51 : f32 to vector<8x96xf32>
    %190 = arith.addf %189, %188 : vector<8x96xf32>
    %191 = arith.divf %189, %190 : vector<8x96xf32>
    %192 = vector.extract_strided_slice %185 {offsets = [0, 96], sizes = [8, 32], strides = [1, 1]} : vector<8x128xf32> to vector<8x32xf32>
    %193 = math.tanh %192 : vector<8x32xf32>
    %194 = vector.extract_strided_slice %191 {offsets = [0, 0], sizes = [8, 32], strides = [1, 1]} : vector<8x96xf32> to vector<8x32xf32>
    %195 = vector.extract_strided_slice %191 {offsets = [0, 32], sizes = [8, 32], strides = [1, 1]} : vector<8x96xf32> to vector<8x32xf32>
    %196 = vector.extract_strided_slice %191 {offsets = [0, 64], sizes = [8, 32], strides = [1, 1]} : vector<8x96xf32> to vector<8x32xf32>
    %197 = arith.mulf %195, %174 : vector<8x32xf32>
    %198 = arith.mulf %194, %193 : vector<8x32xf32>
    %199 = arith.addf %197, %198 : vector<8x32xf32>
    %200 = math.tanh %199 : vector<8x32xf32>
    %201 = arith.mulf %196, %200 : vector<8x32xf32>
    %202 = arith.index_cast %c7_i32 : i32 to index
    %c0_52 = arith.constant 0 : index
    %c0_53 = arith.constant 0 : index
    %203 = vector.load %arg6[%202, %c0_52, %c0_53] : memref<8x8x32xf32, #tpu.memory_space<vmem>>, vector<1x8x32xf32>
    %204 = vector.shape_cast %203 : vector<1x8x32xf32> to vector<8x32xf32>
    %205 = vector.shape_cast %201 : vector<8x32xf32> to vector<1x8x32xf32>
    tpu.vector_store %arg6[%202, %c0_52, %c0_53], %205 {strides = array<i32>} : memref<8x8x32xf32, #tpu.memory_space<vmem>>, vector<1x8x32xf32>,
    %c8_i32 = arith.constant 8 : i32
    %c0_54 = arith.constant 0 : index
    %c0_55 = arith.constant 0 : index
    %206 = vector.load %arg7[%c0_54, %c0_55] : memref<8x32xf32, #tpu.memory_space<vmem>>, vector<8x32xf32>
    tpu.vector_store %arg7[%c0_54, %c0_55], %201 {strides = array<i32>} : memref<8x32xf32, #tpu.memory_space<vmem>>, vector<8x32xf32>,
    %c0_56 = arith.constant 0 : index
    %c0_57 = arith.constant 0 : index
    %207 = vector.load %arg8[%c0_56, %c0_57] : memref<8x32xf32, #tpu.memory_space<vmem>>, vector<8x32xf32>
    tpu.vector_store %arg8[%c0_56, %c0_57], %199 {strides = array<i32>} : memref<8x32xf32, #tpu.memory_space<vmem>>, vector<8x32xf32>,
    return
  }
  func.func @transform_0(%arg0: i32, %arg1: i32) -> (i32, i32, i32) {
    %c0_i32 = arith.constant 0 : i32
    %c0_i32_0 = arith.constant 0 : i32
    return %arg1, %arg0, %c0_i32 : i32, i32, i32
  }
  func.func @transform_1(%arg0: i32, %arg1: i32) -> (i32, i32) {
    %c0_i32 = arith.constant 0 : i32
    %c0_i32_0 = arith.constant 0 : i32
    %c0_i32_1 = arith.constant 0 : i32
    return %c0_i32, %c0_i32_0 : i32, i32
  }
  func.func @transform_2(%arg0: i32, %arg1: i32) -> (i32, i32) {
    %c0_i32 = arith.constant 0 : i32
    %c0_i32_0 = arith.constant 0 : i32
    return %arg0, %c0_i32 : i32, i32
  }
  func.func @transform_3(%arg0: i32, %arg1: i32) -> (i32, i32) {
    %c0_i32 = arith.constant 0 : i32
    %c0_i32_0 = arith.constant 0 : i32
    return %arg0, %c0_i32 : i32, i32
  }
  func.func @transform_4(%arg0: i32, %arg1: i32) -> (i32, i32, i32) {
    %c0_i32 = arith.constant 0 : i32
    %c0_i32_0 = arith.constant 0 : i32
    return %arg1, %arg0, %c0_i32 : i32, i32, i32
  }
}

</mosaic_0001>

<llo_original>
// kernel: tpu_custom_call.1
$region0: #{tpu_custom_call.1}
  #allocation0 [shape = 'u32[]', space=smem, size = 0x4, offset = 0x4, fixed_abs, tag = 'smem constant byte address 0x4 - core index']
  #allocation1 [shape = 'u32[144,128]{1,0:T(1,128)}', space=vmem, size = 0x12000, scoped, tag = 'internal scratch']
  #allocation2 [shape = 'f32[8,32]{1,0:T(8,128)}', space=vmem, size = 0x1000, scoped, tag = 'scratch operand']
  #allocation3 [shape = 'f32[8,32]{1,0:T(8,128)}', space=vmem, size = 0x1000, scoped, tag = 'scratch operand']
  %s0 = inlined_call_operand.hbm [shape: f32[8,8,128], index: 0, kind: input, shape index: {}]
  %s1 = inlined_call_operand.hbm [shape: f32[32,128], index: 1, kind: input, shape index: {}]
  %s2 = inlined_call_operand.hbm [shape: f32[8,32], index: 2, kind: input, shape index: {}]
  %s3 = inlined_call_operand.vmem [shape: f32[8,32], index: 3, kind: input, shape index: {}]
  %s4 = inlined_call_operand.hbm [shape: f32[8,8,32], index: 4, kind: output, shape index: {}]
  %s5 = sld [smem:[#allocation0]]
  $region42: #{tpu_custom_call.1} parent=0
    _
  %s7 = ssub.s32 1, %s5
  %s8 = scalar_select 0, %s7, %s5
  $region1: #{tpu_custom_call.1} parent=0
    #allocation4 [shape = 'u8[32768]{0}', space=vmem, size = 0x8000, scoped, tag = 'input window, operand 0, single buffered']
    #allocation5 [shape = 's32[1]{0}', space=sflag, size = 0x4, scoped, tag = 'scoped memory for tpu_custom_call.1']
    #allocation6 [shape = 's32[1]{0}', space=sflag, size = 0x4, scoped, tag = 'scoped memory for tpu_custom_call.1']
    #allocation7 [shape = 'u8[16384]{0}', space=vmem, size = 0x4000, scoped, tag = 'input window, operand 1, single buffered']
    #allocation8 [shape = 's32[1]{0}', space=sflag, size = 0x4, scoped, tag = 'scoped memory for tpu_custom_call.1']
    #allocation9 [shape = 'u8[4096]{0}', space=vmem, size = 0x1000, scoped, tag = 'input window, operand 2, single buffered']
    #allocation10 [shape = 'u8[32768]{0}', space=vmem, size = 0x8000, scoped, tag = 'output window, operand 0, single buffered']
    %9 = vsyncpa [#allocation5], 0
    %10 = vsyncpa [#allocation8], 0
    %11 = vsyncpa [#allocation6], 0
    // Predicated region
    $region2: #{tpu_custom_call.1} parent=1 // pred_check
      _
    $region3: #{tpu_custom_call.1} parent=1 // pred_check_branch
      %13 = sbr.rel (0) target = $region5
    $region4: #{tpu_custom_call.1} parent=1 // pred_region
      %s15 = ssub.s32 1024, 1024
      %16 = vsyncadd [#allocation5], %s15
      %s17 = sshll.u32 [#allocation4], 4
      %s18 = int_to_ptr.vmem [resolvable:$true] %s17
      %23 = dma.hbm_to_vmem [thread:$0]  %s0, 1024, %s18, [#allocation5], 128, 128, 8
    $region5: #{tpu_custom_call.1} parent=1 // pred_fallthru
      _
    // Predicated region
    $region6: #{tpu_custom_call.1} parent=1 // pred_check
      _
    $region7: #{tpu_custom_call.1} parent=1 // pred_check_branch
      %25 = sbr.rel (0) target = $region9
    $region8: #{tpu_custom_call.1} parent=1 // pred_region
      %s27 = ssub.s32 512, 512
      %28 = vsyncadd [#allocation8], %s27
      %s29 = sshll.u32 [#allocation7], 4
      %s30 = int_to_ptr.vmem [resolvable:$true] %s29
      %35 = dma.hbm_to_vmem [thread:$0]  %s1, 512, %s30, [#allocation8], 128, 128, 8
    $region9: #{tpu_custom_call.1} parent=1 // pred_fallthru
      _
    // Predicated region
    $region10: #{tpu_custom_call.1} parent=1 // pred_check
      _
    $region11: #{tpu_custom_call.1} parent=1 // pred_check_branch
      %37 = sbr.rel (0) target = $region13
    $region12: #{tpu_custom_call.1} parent=1 // pred_region
      %s39 = ssub.s32 128, 128
      %40 = vsyncadd [#allocation8], %s39
      %s42 = sshll.u32 [#allocation9], 4
      %s43 = int_to_ptr.vmem [resolvable:$true] %s42
      %45 = dma.hbm_to_vmem [thread:$0]  %s2, 128, %s43, [#allocation8]
    $region13: #{tpu_custom_call.1} parent=1 // pred_fallthru
      _
    // Predicated region
    $region14: #{tpu_custom_call.1} parent=1 // pred_check
      _
    $region15: #{tpu_custom_call.1} parent=1 // pred_check_branch
      %47 = sbr.rel (0) target = $region17
    $region16: #{tpu_custom_call.1} parent=1 // pred_region
      _
    $region17: #{tpu_custom_call.1} parent=1 // pred_fallthru
      _
    // Predicated region
    $region18: #{tpu_custom_call.1} parent=1 // pred_check
      _
    $region19: #{tpu_custom_call.1} parent=1 // pred_check_branch
      %49 = sbr.rel (0) target = $region21
    $region20: #{tpu_custom_call.1} parent=1 // pred_region
      %50 = dma.done [#allocation5], 1024
    $region21: #{tpu_custom_call.1} parent=1 // pred_fallthru
      _
    // Predicated region
    $region22: #{tpu_custom_call.1} parent=1 // pred_check
      _
    $region23: #{tpu_custom_call.1} parent=1 // pred_check_branch
      %52 = sbr.rel (0) target = $region25
    $region24: #{tpu_custom_call.1} parent=1 // pred_region
      %53 = dma.done [#allocation8], 512
    $region25: #{tpu_custom_call.1} parent=1 // pred_fallthru
      _
    // Predicated region
    $region26: #{tpu_custom_call.1} parent=1 // pred_check
      _
    $region27: #{tpu_custom_call.1} parent=1 // pred_check_branch
      %55 = sbr.rel (0) target = $region29
    $region28: #{tpu_custom_call.1} parent=1 // pred_region
      %56 = dma.done [#allocation8], 128
    $region29: #{tpu_custom_call.1} parent=1 // pred_fallthru
      _
    %p57 = scmp.eq.s32.totalorder 0, 0
    // Predicated region
    $region30: #{tpu_custom_call.1} parent=1 // pred_check
      %p58 = pneg %p57
    $region31: #{tpu_custom_call.1} parent=1 // pred_check_branch
      %60 = sbr.rel (%p58) target = $region33
    $region32: #{tpu_custom_call.1} parent=1 // pred_region
      %v61 = vld [vmem:[#allocation9] sm:$0xff]
      %vm62 = vcmask 261120
      %63 = vst.msk [vmem:[#allocation2] sm:$0xff] %vm62, %v61
      %v64 = vld [vmem:[%s3] sm:$0xff]
      %65 = vst.msk [vmem:[#allocation3] sm:$0xff] %vm62, %v64
    $region33: #{tpu_custom_call.1} parent=1 // pred_fallthru
      _
    %v66 = vld [vmem:[#allocation7] sm:$0xff]
    %v67 = vld [vmem:[#allocation7 + $0x8] sm:$0xff]
    %v68 = vld [vmem:[#allocation7 + $0x10] sm:$0xff]
    %v69 = vld [vmem:[#allocation7 + $0x18] sm:$0xff]
    %v70 = vld [vmem:[#allocation2] sm:$0xff]
    %v71 = vld [vmem:[#allocation3] sm:$0xff]
    %v72 = vld [vmem:[#allocation4] sm:$0xff]
    %vm73 = vcmask 261120
    %v75 = vsel %vm73, %v70, 0
    %77 = vmatprep.subr.mxu0 0.0
    %78 = vmatpush1.msra.mxu0 %v66
    %79 = vmatprep.subr.mxu0 0.0
    %80 = vmatpush1.msra.mxu0 %v67
    %81 = vmatprep.subr.mxu0 0.0
    %82 = vmatpush1.msra.mxu0 %v68
    %83 = vmatprep.subr.mxu0 0.0
    %84 = vmatpush1.msra.mxu0 %v69
    %85 = vmatprep.subr.mxu0 0.0
    %86 = vmatpush1.msra.mxu0 0.0
    %87 = vmatprep.subr.mxu0 0.0
    %88 = vmatpush1.msra.mxu0 0.0
    %89 = vmatprep.subr.mxu0 0.0
    %90 = vmatpush1.msra.mxu0 0.0
    %91 = vmatprep.subr.mxu0 0.0
    %92 = vmatpush1.msra.mxu0 0.0
    %93 = vmatprep.subr.mxu0 0.0
    %94 = vmatpush1.msra.mxu0 0.0
    %95 = vmatprep.subr.mxu0 0.0
    %96 = vmatpush1.msra.mxu0 0.0
    %97 = vmatprep.subr.mxu0 0.0
    %98 = vmatpush1.msra.mxu0 0.0
    %99 = vmatprep.subr.mxu0 0.0
    %100 = vmatpush1.msra.mxu0 0.0
    %101 = vmatprep.subr.mxu0 0.0
    %102 = vmatpush1.msra.mxu0 0.0
    %103 = vmatprep.subr.mxu0 0.0
    %104 = vmatpush1.msra.mxu0 0.0
    %105 = vmatprep.subr.mxu0 0.0
    %106 = vmatpush1.msra.mxu0 0.0
    %107 = vmatprep.subr.mxu0 0.0
    %108 = vmatpush1.msra.mxu0 0.0
    %109 = vmatprep.subr.mxu0 0.0
    %110 = vmatpush1.msra.mxu0 0.0
    %111 = vmatprep.subr.mxu0 0.0
    %112 = vmatpush1.msra.mxu0 0.0
    %113 = vmatprep.subr.mxu0 0.0
    %114 = vmatpush1.msra.mxu0 0.0
    %115 = vmatprep.subr.mxu0 0.0
    %116 = vmatpush1.msra.mxu0 0.0
    %117 = vmatprep.subr.mxu0 0.0
    %118 = vmatpush1.msra.mxu0 0.0
    %119 = vmatprep.subr.mxu0 0.0
    %120 = vmatpush1.msra.mxu0 0.0
    %121 = vmatprep.subr.mxu0 0.0
    %122 = vmatpush1.msra.mxu0 0.0
    %123 = vmatprep.subr.mxu0 0.0
    %124 = vmatpush1.msra.mxu0 0.0
    %125 = vmatprep.subr.mxu0 0.0
    %126 = vmatpush1.msra.mxu0 0.0
    %127 = vmatprep.subr.mxu0 0.0
    %128 = vmatpush1.msra.mxu0 0.0
    %129 = vmatprep.subr.mxu0 0.0
    %130 = vmatpush1.msra.mxu0 0.0
    %131 = vmatprep.subr.mxu0 0.0
    %132 = vmatpush1.msra.mxu0 0.0
    %133 = vmatprep.subr.mxu0 0.0
    %134 = vmatpush1.msra.mxu0 0.0
    %135 = vmatprep.subr.mxu0 0.0
    %136 = vmatpush1.msra.mxu0 0.0
    %137 = vmatprep.subr.mxu0 0.0
    %138 = vmatpush1.msra.mxu0 0.0
    %139 = vmatprep.subr.mxu0 0.0
    %140 = vmatpush1.msra.mxu0 0.0
    %141 = vmatprep.mubr.f32.mxu0 0.0
    %142 = vmatmul.mubr.f32.gmra.mrb[0].mxu0 %v75
    %v143 = vpop.f32.mrb[0].mxu0
    %v144 = vadd.f32 0.0, %v143
    %v145 = vpop.f32.mrb[0].mxu0
    %146 = vdwg.mxu0
    %v147 = vadd.f32 %v72, %v144
    %v148 = vxor.u32 %v147, 2147483648
    %v149 = vmul.f32 %v148, 1.442695
    %v150 = vpow.pop %v149
    %v151 = vadd.f32 %v150, 1.0
    %v152 = vrcp.pop %v151
    %v153 = vmul.f32 1.0, %v152
    %v154 = vtanh.pop %v147
    %156 = vrot.lane.b32.xlu0 %v71, 32
    %v157 = vpop.permute.xlu0 %156
    %v159 = vmul.f32 %v153, %v157
    %161 = vrot.lane.b32.xlu0 %v154, 32
    %v162 = vpop.permute.xlu0 %161
    %v164 = vmul.f32 %v153, %v162
    %166 = vrot.lane.b32.xlu0 %v164, 32
    %v167 = vpop.permute.xlu0 %166
    %v169 = vadd.f32 %v159, %v167
    %v170 = vtanh.pop %v169
    %172 = vrot.lane.b32.xlu0 %v170, 32
    %v173 = vpop.permute.xlu0 %172
    %v175 = vmul.f32 %v153, %v173
    %177 = vrot.lane.b32.xlu0 %v175, 64
    %v178 = vpop.permute.xlu0 %177
    %180 = vst.msk [vmem:[#allocation10] sm:$0xff] %vm73, %v178
    %s181 = scalar_lea.vmem [#allocation4], 8
    %v182 = vld [vmem:[%s181] sm:$0xff]
    %v183 = vsel %vm73, %v178, 0
    %185 = vmatprep.subr.mxu0 0.0
    %186 = vmatpush1.msra.mxu0 %v66
    %187 = vmatprep.subr.mxu0 0.0
    %188 = vmatpush1.msra.mxu0 %v67
    %189 = vmatprep.subr.mxu0 0.0
    %190 = vmatpush1.msra.mxu0 %v68
    %191 = vmatprep.subr.mxu0 0.0
    %192 = vmatpush1.msra.mxu0 %v69
    %193 = vmatprep.subr.mxu0 0.0
    %194 = vmatpush1.msra.mxu0 0.0
    %195 = vmatprep.subr.mxu0 0.0
    %196 = vmatpush1.msra.mxu0 0.0
    %197 = vmatprep.subr.mxu0 0.0
    %198 = vmatpush1.msra.mxu0 0.0
    %199 = vmatprep.subr.mxu0 0.0
    %200 = vmatpush1.msra.mxu0 0.0
    %201 = vmatprep.subr.mxu0 0.0
    %202 = vmatpush1.msra.mxu0 0.0
    %203 = vmatprep.subr.mxu0 0.0
    %204 = vmatpush1.msra.mxu0 0.0
    %205 = vmatprep.subr.mxu0 0.0
    %206 = vmatpush1.msra.mxu0 0.0
    %207 = vmatprep.subr.mxu0 0.0
    %208 = vmatpush1.msra.mxu0 0.0
    %209 = vmatprep.subr.mxu0 0.0
    %210 = vmatpush1.msra.mxu0 0.0
    %211 = vmatprep.subr.mxu0 0.0
    %212 = vmatpush1.msra.mxu0 0.0
    %213 = vmatprep.subr.mxu0 0.0
    %214 = vmatpush1.msra.mxu0 0.0
    %215 = vmatprep.subr.mxu0 0.0
    %216 = vmatpush1.msra.mxu0 0.0
    %217 = vmatprep.subr.mxu0 0.0
    %218 = vmatpush1.msra.mxu0 0.0
    %219 = vmatprep.subr.mxu0 0.0
    %220 = vmatpush1.msra.mxu0 0.0
    %221 = vmatprep.subr.mxu0 0.0
    %222 = vmatpush1.msra.mxu0 0.0
    %223 = vmatprep.subr.mxu0 0.0
    %224 = vmatpush1.msra.mxu0 0.0
    %225 = vmatprep.subr.mxu0 0.0
    %226 = vmatpush1.msra.mxu0 0.0
    %227 = vmatprep.subr.mxu0 0.0
    %228 = vmatpush1.msra.mxu0 0.0
    %229 = vmatprep.subr.mxu0 0.0
    %230 = vmatpush1.msra.mxu0 0.0
    %231 = vmatprep.subr.mxu0 0.0
    %232 = vmatpush1.msra.mxu0 0.0
    %233 = vmatprep.subr.mxu0 0.0
    %234 = vmatpush1.msra.mxu0 0.0
    %235 = vmatprep.subr.mxu0 0.0
    %236 = vmatpush1.msra.mxu0 0.0
    %237 = vmatprep.subr.mxu0 0.0
    %238 = vmatpush1.msra.mxu0 0.0
    %239 = vmatprep.subr.mxu0 0.0
    %240 = vmatpush1.msra.mxu0 0.0
    %241 = vmatprep.subr.mxu0 0.0
    %242 = vmatpush1.msra.mxu0 0.0
    %243 = vmatprep.subr.mxu0 0.0
    %244 = vmatpush1.msra.mxu0 0.0
    %245 = vmatprep.subr.mxu0 0.0
    %246 = vmatpush1.msra.mxu0 0.0
    %247 = vmatprep.subr.mxu0 0.0
    %248 = vmatpush1.msra.mxu0 0.0
    %249 = vmatprep.mubr.f32.mxu0 0.0
    %250 = vmatmul.mubr.f32.gmra.mrb[0].mxu0 %v183
    %v251 = vpop.f32.mrb[0].mxu0
    %v252 = vadd.f32 0.0, %v251
    %v253 = vpop.f32.mrb[0].mxu0
    %254 = vdwg.mxu0
    %v255 = vadd.f32 %v182, %v252
    %v256 = vxor.u32 %v255, 2147483648
    %v257 = vmul.f32 %v256, 1.442695
    %v258 = vpow.pop %v257
    %v259 = vadd.f32 %v258, 1.0
    %v260 = vrcp.pop %v259
    %v261 = vmul.f32 1.0, %v260
    %v262 = vtanh.pop %v255
    %v263 = vmul.f32 %v261, %v169
    %265 = vrot.lane.b32.xlu0 %v262, 32
    %v266 = vpop.permute.xlu0 %265
    %v268 = vmul.f32 %v261, %v266
    %270 = vrot.lane.b32.xlu0 %v268, 32
    %v271 = vpop.permute.xlu0 %270
    %v273 = vadd.f32 %v263, %v271
    %v274 = vtanh.pop %v273
    %276 = vrot.lane.b32.xlu0 %v274, 32
    %v277 = vpop.permute.xlu0 %276
    %v279 = vmul.f32 %v261, %v277
    %281 = vrot.lane.b32.xlu0 %v279, 64
    %v282 = vpop.permute.xlu0 %281
    %s284 = scalar_lea.vmem [#allocation10], 8
    %285 = vst.msk [vmem:[%s284] sm:$0xff] %vm73, %v282
    %s286 = scalar_lea.vmem [#allocation4], 16
    %v287 = vld [vmem:[%s286] sm:$0xff]
    %v288 = vsel %vm73, %v282, 0
    %290 = vmatprep.subr.mxu0 0.0
    %291 = vmatpush1.msra.mxu0 %v66
    %292 = vmatprep.subr.mxu0 0.0
    %293 = vmatpush1.msra.mxu0 %v67
    %294 = vmatprep.subr.mxu0 0.0
    %295 = vmatpush1.msra.mxu0 %v68
    %296 = vmatprep.subr.mxu0 0.0
    %297 = vmatpush1.msra.mxu0 %v69
    %298 = vmatprep.subr.mxu0 0.0
    %299 = vmatpush1.msra.mxu0 0.0
    %300 = vmatprep.subr.mxu0 0.0
    %301 = vmatpush1.msra.mxu0 0.0
    %302 = vmatprep.subr.mxu0 0.0
    %303 = vmatpush1.msra.mxu0 0.0
    %304 = vmatprep.subr.mxu0 0.0
    %305 = vmatpush1.msra.mxu0 0.0
    %306 = vmatprep.subr.mxu0 0.0
    %307 = vmatpush1.msra.mxu0 0.0
    %308 = vmatprep.subr.mxu0 0.0
    %309 = vmatpush1.msra.mxu0 0.0
    %310 = vmatprep.subr.mxu0 0.0
    %311 = vmatpush1.msra.mxu0 0.0
    %312 = vmatprep.subr.mxu0 0.0
    %313 = vmatpush1.msra.mxu0 0.0
    %314 = vmatprep.subr.mxu0 0.0
    %315 = vmatpush1.msra.mxu0 0.0
    %316 = vmatprep.subr.mxu0 0.0
    %317 = vmatpush1.msra.mxu0 0.0
    %318 = vmatprep.subr.mxu0 0.0
    %319 = vmatpush1.msra.mxu0 0.0
    %320 = vmatprep.subr.mxu0 0.0
    %321 = vmatpush1.msra.mxu0 0.0
    %322 = vmatprep.subr.mxu0 0.0
    %323 = vmatpush1.msra.mxu0 0.0
    %324 = vmatprep.subr.mxu0 0.0
    %325 = vmatpush1.msra.mxu0 0.0
    %326 = vmatprep.subr.mxu0 0.0
    %327 = vmatpush1.msra.mxu0 0.0
    %328 = vmatprep.subr.mxu0 0.0
    %329 = vmatpush1.msra.mxu0 0.0
    %330 = vmatprep.subr.mxu0 0.0
    %331 = vmatpush1.msra.mxu0 0.0
    %332 = vmatprep.subr.mxu0 0.0
    %333 = vmatpush1.msra.mxu0 0.0
    %334 = vmatprep.subr.mxu0 0.0
    %335 = vmatpush1.msra.mxu0 0.0
    %336 = vmatprep.subr.mxu0 0.0
    %337 = vmatpush1.msra.mxu0 0.0
    %338 = vmatprep.subr.mxu0 0.0
    %339 = vmatpush1.msra.mxu0 0.0
    %340 = vmatprep.subr.mxu0 0.0
    %341 = vmatpush1.msra.mxu0 0.0
    %342 = vmatprep.subr.mxu0 0.0
    %343 = vmatpush1.msra.mxu0 0.0
    %344 = vmatprep.subr.mxu0 0.0
    %345 = vmatpush1.msra.mxu0 0.0
    %346 = vmatprep.subr.mxu0 0.0
    %347 = vmatpush1.msra.mxu0 0.0
    %348 = vmatprep.subr.mxu0 0.0
    %349 = vmatpush1.msra.mxu0 0.0
    %350 = vmatprep.subr.mxu0 0.0
    %351 = vmatpush1.msra.mxu0 0.0
    %352 = vmatprep.subr.mxu0 0.0
    %353 = vmatpush1.msra.mxu0 0.0
    %354 = vmatprep.mubr.f32.mxu0 0.0
    %355 = vmatmul.mubr.f32.gmra.mrb[0].mxu0 %v288
    %v356 = vpop.f32.mrb[0].mxu0
    %v357 = vadd.f32 0.0, %v356
    %v358 = vpop.f32.mrb[0].mxu0
    %359 = vdwg.mxu0
    %v360 = vadd.f32 %v287, %v357
    %v361 = vxor.u32 %v360, 2147483648
    %v362 = vmul.f32 %v361, 1.442695
    %v363 = vpow.pop %v362
    %v364 = vadd.f32 %v363, 1.0
    %v365 = vrcp.pop %v364
    %v366 = vmul.f32 1.0, %v365
    %v367 = vtanh.pop %v360
    %v368 = vmul.f32 %v366, %v273
    %370 = vrot.lane.b32.xlu0 %v367, 32
    %v371 = vpop.permute.xlu0 %370
    %v373 = vmul.f32 %v366, %v371
    %375 = vrot.lane.b32.xlu0 %v373, 32
    %v376 = vpop.permute.xlu0 %375
    %v378 = vadd.f32 %v368, %v376
    %v379 = vtanh.pop %v378
    %381 = vrot.lane.b32.xlu0 %v379, 32
    %v382 = vpop.permute.xlu0 %381
    %v384 = vmul.f32 %v366, %v382
    %386 = vrot.lane.b32.xlu0 %v384, 64
    %v387 = vpop.permute.xlu0 %386
    %s389 = scalar_lea.vmem [#allocation10], 16
    %390 = vst.msk [vmem:[%s389] sm:$0xff] %vm73, %v387
    %s391 = scalar_lea.vmem [#allocation4], 24
    %v392 = vld [vmem:[%s391] sm:$0xff]
    %v393 = vsel %vm73, %v387, 0
    %395 = vmatprep.subr.mxu0 0.0
    %396 = vmatpush1.msra.mxu0 %v66
    %397 = vmatprep.subr.mxu0 0.0
    %398 = vmatpush1.msra.mxu0 %v67
    %399 = vmatprep.subr.mxu0 0.0
    %400 = vmatpush1.msra.mxu0 %v68
    %401 = vmatprep.subr.mxu0 0.0
    %402 = vmatpush1.msra.mxu0 %v69
    %403 = vmatprep.subr.mxu0 0.0
    %404 = vmatpush1.msra.mxu0 0.0
    %405 = vmatprep.subr.mxu0 0.0
    %406 = vmatpush1.msra.mxu0 0.0
    %407 = vmatprep.subr.mxu0 0.0
    %408 = vmatpush1.msra.mxu0 0.0
    %409 = vmatprep.subr.mxu0 0.0
    %410 = vmatpush1.msra.mxu0 0.0
    %411 = vmatprep.subr.mxu0 0.0
    %412 = vmatpush1.msra.mxu0 0.0
    %413 = vmatprep.subr.mxu0 0.0
    %414 = vmatpush1.msra.mxu0 0.0
    %415 = vmatprep.subr.mxu0 0.0
    %416 = vmatpush1.msra.mxu0 0.0
    %417 = vmatprep.subr.mxu0 0.0
    %418 = vmatpush1.msra.mxu0 0.0
    %419 = vmatprep.subr.mxu0 0.0
    %420 = vmatpush1.msra.mxu0 0.0
    %421 = vmatprep.subr.mxu0 0.0
    %422 = vmatpush1.msra.mxu0 0.0
    %423 = vmatprep.subr.mxu0 0.0
    %424 = vmatpush1.msra.mxu0 0.0
    %425 = vmatprep.subr.mxu0 0.0
    %426 = vmatpush1.msra.mxu0 0.0
    %427 = vmatprep.subr.mxu0 0.0
    %428 = vmatpush1.msra.mxu0 0.0
    %429 = vmatprep.subr.mxu0 0.0
    %430 = vmatpush1.msra.mxu0 0.0
    %431 = vmatprep.subr.mxu0 0.0
    %432 = vmatpush1.msra.mxu0 0.0
    %433 = vmatprep.subr.mxu0 0.0
    %434 = vmatpush1.msra.mxu0 0.0
    %435 = vmatprep.subr.mxu0 0.0
    %436 = vmatpush1.msra.mxu0 0.0
    %437 = vmatprep.subr.mxu0 0.0
    %438 = vmatpush1.msra.mxu0 0.0
    %439 = vmatprep.subr.mxu0 0.0
    %440 = vmatpush1.msra.mxu0 0.0
    %441 = vmatprep.subr.mxu0 0.0
    %442 = vmatpush1.msra.mxu0 0.0
    %443 = vmatprep.subr.mxu0 0.0
    %444 = vmatpush1.msra.mxu0 0.0
    %445 = vmatprep.subr.mxu0 0.0
    %446 = vmatpush1.msra.mxu0 0.0
    %447 = vmatprep.subr.mxu0 0.0
    %448 = vmatpush1.msra.mxu0 0.0
    %449 = vmatprep.subr.mxu0 0.0
    %450 = vmatpush1.msra.mxu0 0.0
    %451 = vmatprep.subr.mxu0 0.0
    %452 = vmatpush1.msra.mxu0 0.0
    %453 = vmatprep.subr.mxu0 0.0
    %454 = vmatpush1.msra.mxu0 0.0
    %455 = vmatprep.subr.mxu0 0.0
    %456 = vmatpush1.msra.mxu0 0.0
    %457 = vmatprep.subr.mxu0 0.0
    %458 = vmatpush1.msra.mxu0 0.0
    %459 = vmatprep.mubr.f32.mxu0 0.0
    %460 = vmatmul.mubr.f32.gmra.mrb[0].mxu0 %v393
    %v461 = vpop.f32.mrb[0].mxu0
    %v462 = vadd.f32 0.0, %v461
    %v463 = vpop.f32.mrb[0].mxu0
    %464 = vdwg.mxu0
    %v465 = vadd.f32 %v392, %v462
    %v466 = vxor.u32 %v465, 2147483648
    %v467 = vmul.f32 %v466, 1.442695
    %v468 = vpow.pop %v467
    %v469 = vadd.f32 %v468, 1.0
    %v470 = vrcp.pop %v469
    %v471 = vmul.f32 1.0, %v470
    %v472 = vtanh.pop %v465
    %v473 = vmul.f32 %v471, %v378
    %475 = vrot.lane.b32.xlu0 %v472, 32
    %v476 = vpop.permute.xlu0 %475
    %v478 = vmul.f32 %v471, %v476
    %480 = vrot.lane.b32.xlu0 %v478, 32
    %v481 = vpop.permute.xlu0 %480
    %v483 = vadd.f32 %v473, %v481
    %v484 = vtanh.pop %v483
    %486 = vrot.lane.b32.xlu0 %v484, 32
    %v487 = vpop.permute.xlu0 %486
    %v489 = vmul.f32 %v471, %v487
    %491 = vrot.lane.b32.xlu0 %v489, 64
    %v492 = vpop.permute.xlu0 %491
    %s494 = scalar_lea.vmem [#allocation10], 24
    %495 = vst.msk [vmem:[%s494] sm:$0xff] %vm73, %v492
    %s496 = scalar_lea.vmem [#allocation4], 32
    %v497 = vld [vmem:[%s496] sm:$0xff]
    %v498 = vsel %vm73, %v492, 0
    %500 = vmatprep.subr.mxu0 0.0
    %501 = vmatpush1.msra.mxu0 %v66
    %502 = vmatprep.subr.mxu0 0.0
    %503 = vmatpush1.msra.mxu0 %v67
    %504 = vmatprep.subr.mxu0 0.0
    %505 = vmatpush1.msra.mxu0 %v68
    %506 = vmatprep.subr.mxu0 0.0
    %507 = vmatpush1.msra.mxu0 %v69
    %508 = vmatprep.subr.mxu0 0.0
    %509 = vmatpush1.msra.mxu0 0.0
    %510 = vmatprep.subr.mxu0 0.0
    %511 = vmatpush1.msra.mxu0 0.0
    %512 = vmatprep.subr.mxu0 0.0
    %513 = vmatpush1.msra.mxu0 0.0
    %514 = vmatprep.subr.mxu0 0.0
    %515 = vmatpush1.msra.mxu0 0.0
    %516 = vmatprep.subr.mxu0 0.0
    %517 = vmatpush1.msra.mxu0 0.0
    %518 = vmatprep.subr.mxu0 0.0
    %519 = vmatpush1.msra.mxu0 0.0
    %520 = vmatprep.subr.mxu0 0.0
    %521 = vmatpush1.msra.mxu0 0.0
    %522 = vmatprep.subr.mxu0 0.0
    %523 = vmatpush1.msra.mxu0 0.0
    %524 = vmatprep.subr.mxu0 0.0
    %525 = vmatpush1.msra.mxu0 0.0
    %526 = vmatprep.subr.mxu0 0.0
    %527 = vmatpush1.msra.mxu0 0.0
    %528 = vmatprep.subr.mxu0 0.0
    %529 = vmatpush1.msra.mxu0 0.0
    %530 = vmatprep.subr.mxu0 0.0
    %531 = vmatpush1.msra.mxu0 0.0
    %532 = vmatprep.subr.mxu0 0.0
    %533 = vmatpush1.msra.mxu0 0.0
    %534 = vmatprep.subr.mxu0 0.0
    %535 = vmatpush1.msra.mxu0 0.0
    %536 = vmatprep.subr.mxu0 0.0
    %537 = vmatpush1.msra.mxu0 0.0
    %538 = vmatprep.subr.mxu0 0.0
    %539 = vmatpush1.msra.mxu0 0.0
    %540 = vmatprep.subr.mxu0 0.0
    %541 = vmatpush1.msra.mxu0 0.0
    %542 = vmatprep.subr.mxu0 0.0
    %543 = vmatpush1.msra.mxu0 0.0
    %544 = vmatprep.subr.mxu0 0.0
    %545 = vmatpush1.msra.mxu0 0.0
    %546 = vmatprep.subr.mxu0 0.0
    %547 = vmatpush1.msra.mxu0 0.0
    %548 = vmatprep.subr.mxu0 0.0
    %549 = vmatpush1.msra.mxu0 0.0
    %550 = vmatprep.subr.mxu0 0.0
    %551 = vmatpush1.msra.mxu0 0.0
    %552 = vmatprep.subr.mxu0 0.0
    %553 = vmatpush1.msra.mxu0 0.0
    %554 = vmatprep.subr.mxu0 0.0
    %555 = vmatpush1.msra.mxu0 0.0
    %556 = vmatprep.subr.mxu0 0.0
    %557 = vmatpush1.msra.mxu0 0.0
    %558 = vmatprep.subr.mxu0 0.0
    %559 = vmatpush1.msra.mxu0 0.0
    %560 = vmatprep.subr.mxu0 0.0
    %561 = vmatpush1.msra.mxu0 0.0
    %562 = vmatprep.subr.mxu0 0.0
    %563 = vmatpush1.msra.mxu0 0.0
    %564 = vmatprep.mubr.f32.mxu0 0.0
    %565 = vmatmul.mubr.f32.gmra.mrb[0].mxu0 %v498
    %v566 = vpop.f32.mrb[0].mxu0
    %v567 = vadd.f32 0.0, %v566
    %v568 = vpop.f32.mrb[0].mxu0
    %569 = vdwg.mxu0
    %v570 = vadd.f32 %v497, %v567
    %v571 = vxor.u32 %v570, 2147483648
    %v572 = vmul.f32 %v571, 1.442695
    %v573 = vpow.pop %v572
    %v574 = vadd.f32 %v573, 1.0
    %v575 = vrcp.pop %v574
    %v576 = vmul.f32 1.0, %v575
    %v577 = vtanh.pop %v570
    %v578 = vmul.f32 %v576, %v483
    %580 = vrot.lane.b32.xlu0 %v577, 32
    %v581 = vpop.permute.xlu0 %580
    %v583 = vmul.f32 %v576, %v581
    %585 = vrot.lane.b32.xlu0 %v583, 32
    %v586 = vpop.permute.xlu0 %585
    %v588 = vadd.f32 %v578, %v586
    %v589 = vtanh.pop %v588
    %591 = vrot.lane.b32.xlu0 %v589, 32
    %v592 = vpop.permute.xlu0 %591
    %v594 = vmul.f32 %v576, %v592
    %596 = vrot.lane.b32.xlu0 %v594, 64
    %v597 = vpop.permute.xlu0 %596
    %s599 = scalar_lea.vmem [#allocation10], 32
    %600 = vst.msk [vmem:[%s599] sm:$0xff] %vm73, %v597
    %s601 = scalar_lea.vmem [#allocation4], 40
    %v602 = vld [vmem:[%s601] sm:$0xff]
    %v603 = vsel %vm73, %v597, 0
    %605 = vmatprep.subr.mxu0 0.0
    %606 = vmatpush1.msra.mxu0 %v66
    %607 = vmatprep.subr.mxu0 0.0
    %608 = vmatpush1.msra.mxu0 %v67
    %609 = vmatprep.subr.mxu0 0.0
    %610 = vmatpush1.msra.mxu0 %v68
    %611 = vmatprep.subr.mxu0 0.0
    %612 = vmatpush1.msra.mxu0 %v69
    %613 = vmatprep.subr.mxu0 0.0
    %614 = vmatpush1.msra.mxu0 0.0
    %615 = vmatprep.subr.mxu0 0.0
    %616 = vmatpush1.msra.mxu0 0.0
    %617 = vmatprep.subr.mxu0 0.0
    %618 = vmatpush1.msra.mxu0 0.0
    %619 = vmatprep.subr.mxu0 0.0
    %620 = vmatpush1.msra.mxu0 0.0
    %621 = vmatprep.subr.mxu0 0.0
    %622 = vmatpush1.msra.mxu0 0.0
    %623 = vmatprep.subr.mxu0 0.0
    %624 = vmatpush1.msra.mxu0 0.0
    %625 = vmatprep.subr.mxu0 0.0
    %626 = vmatpush1.msra.mxu0 0.0
    %627 = vmatprep.subr.mxu0 0.0
    %628 = vmatpush1.msra.mxu0 0.0
    %629 = vmatprep.subr.mxu0 0.0
    %630 = vmatpush1.msra.mxu0 0.0
    %631 = vmatprep.subr.mxu0 0.0
    %632 = vmatpush1.msra.mxu0 0.0
    %633 = vmatprep.subr.mxu0 0.0
    %634 = vmatpush1.msra.mxu0 0.0
    %635 = vmatprep.subr.mxu0 0.0
    %636 = vmatpush1.msra.mxu0 0.0
    %637 = vmatprep.subr.mxu0 0.0
    %638 = vmatpush1.msra.mxu0 0.0
    %639 = vmatprep.subr.mxu0 0.0
    %640 = vmatpush1.msra.mxu0 0.0
    %641 = vmatprep.subr.mxu0 0.0
    %642 = vmatpush1.msra.mxu0 0.0
    %643 = vmatprep.subr.mxu0 0.0
    %644 = vmatpush1.msra.mxu0 0.0
    %645 = vmatprep.subr.mxu0 0.0
    %646 = vmatpush1.msra.mxu0 0.0
    %647 = vmatprep.subr.mxu0 0.0
    %648 = vmatpush1.msra.mxu0 0.0
    %649 = vmatprep.subr.mxu0 0.0
    %650 = vmatpush1.msra.mxu0 0.0
    %651 = vmatprep.subr.mxu0 0.0
    %652 = vmatpush1.msra.mxu0 0.0
    %653 = vmatprep.subr.mxu0 0.0
    %654 = vmatpush1.msra.mxu0 0.0
    %655 = vmatprep.subr.mxu0 0.0
    %656 = vmatpush1.msra.mxu0 0.0
    %657 = vmatprep.subr.mxu0 0.0
    %658 = vmatpush1.msra.mxu0 0.0
    %659 = vmatprep.subr.mxu0 0.0
    %660 = vmatpush1.msra.mxu0 0.0
    %661 = vmatprep.subr.mxu0 0.0
    %662 = vmatpush1.msra.mxu0 0.0
    %663 = vmatprep.subr.mxu0 0.0
    %664 = vmatpush1.msra.mxu0 0.0
    %665 = vmatprep.subr.mxu0 0.0
    %666 = vmatpush1.msra.mxu0 0.0
    %667 = vmatprep.subr.mxu0 0.0
    %668 = vmatpush1.msra.mxu0 0.0
    %669 = vmatprep.mubr.f32.mxu0 0.0
    %670 = vmatmul.mubr.f32.gmra.mrb[0].mxu0 %v603
    %v671 = vpop.f32.mrb[0].mxu0
    %v672 = vadd.f32 0.0, %v671
    %v673 = vpop.f32.mrb[0].mxu0
    %674 = vdwg.mxu0
    %v675 = vadd.f32 %v602, %v672
    %v676 = vxor.u32 %v675, 2147483648
    %v677 = vmul.f32 %v676, 1.442695
    %v678 = vpow.pop %v677
    %v679 = vadd.f32 %v678, 1.0
    %v680 = vrcp.pop %v679
    %v681 = vmul.f32 1.0, %v680
    %v682 = vtanh.pop %v675
    %v683 = vmul.f32 %v681, %v588
    %685 = vrot.lane.b32.xlu0 %v682, 32
    %v686 = vpop.permute.xlu0 %685
    %v688 = vmul.f32 %v681, %v686
    %690 = vrot.lane.b32.xlu0 %v688, 32
    %v691 = vpop.permute.xlu0 %690
    %v693 = vadd.f32 %v683, %v691
    %v694 = vtanh.pop %v693
    %696 = vrot.lane.b32.xlu0 %v694, 32
    %v697 = vpop.permute.xlu0 %696
    %v699 = vmul.f32 %v681, %v697
    %701 = vrot.lane.b32.xlu0 %v699, 64
    %v702 = vpop.permute.xlu0 %701
    %s704 = scalar_lea.vmem [#allocation10], 40
    %705 = vst.msk [vmem:[%s704] sm:$0xff] %vm73, %v702
    %s706 = scalar_lea.vmem [#allocation4], 48
    %v707 = vld [vmem:[%s706] sm:$0xff]
    %v708 = vsel %vm73, %v702, 0
    %710 = vmatprep.subr.mxu0 0.0
    %711 = vmatpush1.msra.mxu0 %v66
    %712 = vmatprep.subr.mxu0 0.0
    %713 = vmatpush1.msra.mxu0 %v67
    %714 = vmatprep.subr.mxu0 0.0
    %715 = vmatpush1.msra.mxu0 %v68
    %716 = vmatprep.subr.mxu0 0.0
    %717 = vmatpush1.msra.mxu0 %v69
    %718 = vmatprep.subr.mxu0 0.0
    %719 = vmatpush1.msra.mxu0 0.0
    %720 = vmatprep.subr.mxu0 0.0
    %721 = vmatpush1.msra.mxu0 0.0
    %722 = vmatprep.subr.mxu0 0.0
    %723 = vmatpush1.msra.mxu0 0.0
    %724 = vmatprep.subr.mxu0 0.0
    %725 = vmatpush1.msra.mxu0 0.0
    %726 = vmatprep.subr.mxu0 0.0
    %727 = vmatpush1.msra.mxu0 0.0
    %728 = vmatprep.subr.mxu0 0.0
    %729 = vmatpush1.msra.mxu0 0.0
    %730 = vmatprep.subr.mxu0 0.0
    %731 = vmatpush1.msra.mxu0 0.0
    %732 = vmatprep.subr.mxu0 0.0
    %733 = vmatpush1.msra.mxu0 0.0
    %734 = vmatprep.subr.mxu0 0.0
    %735 = vmatpush1.msra.mxu0 0.0
    %736 = vmatprep.subr.mxu0 0.0
    %737 = vmatpush1.msra.mxu0 0.0
    %738 = vmatprep.subr.mxu0 0.0
    %739 = vmatpush1.msra.mxu0 0.0
    %740 = vmatprep.subr.mxu0 0.0
    %741 = vmatpush1.msra.mxu0 0.0
    %742 = vmatprep.subr.mxu0 0.0
    %743 = vmatpush1.msra.mxu0 0.0
    %744 = vmatprep.subr.mxu0 0.0
    %745 = vmatpush1.msra.mxu0 0.0
    %746 = vmatprep.subr.mxu0 0.0
    %747 = vmatpush1.msra.mxu0 0.0
    %748 = vmatprep.subr.mxu0 0.0
    %749 = vmatpush1.msra.mxu0 0.0
    %750 = vmatprep.subr.mxu0 0.0
    %751 = vmatpush1.msra.mxu0 0.0
    %752 = vmatprep.subr.mxu0 0.0
    %753 = vmatpush1.msra.mxu0 0.0
    %754 = vmatprep.subr.mxu0 0.0
    %755 = vmatpush1.msra.mxu0 0.0
    %756 = vmatprep.subr.mxu0 0.0
    %757 = vmatpush1.msra.mxu0 0.0
    %758 = vmatprep.subr.mxu0 0.0
    %759 = vmatpush1.msra.mxu0 0.0
    %760 = vmatprep.subr.mxu0 0.0
    %761 = vmatpush1.msra.mxu0 0.0
    %762 = vmatprep.subr.mxu0 0.0
    %763 = vmatpush1.msra.mxu0 0.0
    %764 = vmatprep.subr.mxu0 0.0
    %765 = vmatpush1.msra.mxu0 0.0
    %766 = vmatprep.subr.mxu0 0.0
    %767 = vmatpush1.msra.mxu0 0.0
    %768 = vmatprep.subr.mxu0 0.0
    %769 = vmatpush1.msra.mxu0 0.0
    %770 = vmatprep.subr.mxu0 0.0
    %771 = vmatpush1.msra.mxu0 0.0
    %772 = vmatprep.subr.mxu0 0.0
    %773 = vmatpush1.msra.mxu0 0.0
    %774 = vmatprep.mubr.f32.mxu0 0.0
    %775 = vmatmul.mubr.f32.gmra.mrb[0].mxu0 %v708
    %v776 = vpop.f32.mrb[0].mxu0
    %v777 = vadd.f32 0.0, %v776
    %v778 = vpop.f32.mrb[0].mxu0
    %779 = vdwg.mxu0
    %v780 = vadd.f32 %v707, %v777
    %v781 = vxor.u32 %v780, 2147483648
    %v782 = vmul.f32 %v781, 1.442695
    %v783 = vpow.pop %v782
    %v784 = vadd.f32 %v783, 1.0
    %v785 = vrcp.pop %v784
    %v786 = vmul.f32 1.0, %v785
    %v787 = vtanh.pop %v780
    %v788 = vmul.f32 %v786, %v693
    %790 = vrot.lane.b32.xlu0 %v787, 32
    %v791 = vpop.permute.xlu0 %790
    %v793 = vmul.f32 %v786, %v791
    %795 = vrot.lane.b32.xlu0 %v793, 32
    %v796 = vpop.permute.xlu0 %795
    %v798 = vadd.f32 %v788, %v796
    %v799 = vtanh.pop %v798
    %801 = vrot.lane.b32.xlu0 %v799, 32
    %v802 = vpop.permute.xlu0 %801
    %v804 = vmul.f32 %v786, %v802
    %806 = vrot.lane.b32.xlu0 %v804, 64
    %v807 = vpop.permute.xlu0 %806
    %s809 = scalar_lea.vmem [#allocation10], 48
    %810 = vst.msk [vmem:[%s809] sm:$0xff] %vm73, %v807
    %s811 = scalar_lea.vmem [#allocation4], 56
    %v812 = vld [vmem:[%s811] sm:$0xff]
    %v813 = vsel %vm73, %v807, 0
    %815 = vmatprep.subr.mxu0 0.0
    %816 = vmatpush1.msra.mxu0 %v66
    %817 = vmatprep.subr.mxu0 0.0
    %818 = vmatpush1.msra.mxu0 %v67
    %819 = vmatprep.subr.mxu0 0.0
    %820 = vmatpush1.msra.mxu0 %v68
    %821 = vmatprep.subr.mxu0 0.0
    %822 = vmatpush1.msra.mxu0 %v69
    %823 = vmatprep.subr.mxu0 0.0
    %824 = vmatpush1.msra.mxu0 0.0
    %825 = vmatprep.subr.mxu0 0.0
    %826 = vmatpush1.msra.mxu0 0.0
    %827 = vmatprep.subr.mxu0 0.0
    %828 = vmatpush1.msra.mxu0 0.0
    %829 = vmatprep.subr.mxu0 0.0
    %830 = vmatpush1.msra.mxu0 0.0
    %831 = vmatprep.subr.mxu0 0.0
    %832 = vmatpush1.msra.mxu0 0.0
    %833 = vmatprep.subr.mxu0 0.0
    %834 = vmatpush1.msra.mxu0 0.0
    %835 = vmatprep.subr.mxu0 0.0
    %836 = vmatpush1.msra.mxu0 0.0
    %837 = vmatprep.subr.mxu0 0.0
    %838 = vmatpush1.msra.mxu0 0.0
    %839 = vmatprep.subr.mxu0 0.0
    %840 = vmatpush1.msra.mxu0 0.0
    %841 = vmatprep.subr.mxu0 0.0
    %842 = vmatpush1.msra.mxu0 0.0
    %843 = vmatprep.subr.mxu0 0.0
    %844 = vmatpush1.msra.mxu0 0.0
    %845 = vmatprep.subr.mxu0 0.0
    %846 = vmatpush1.msra.mxu0 0.0
    %847 = vmatprep.subr.mxu0 0.0
    %848 = vmatpush1.msra.mxu0 0.0
    %849 = vmatprep.subr.mxu0 0.0
    %850 = vmatpush1.msra.mxu0 0.0
    %851 = vmatprep.subr.mxu0 0.0
    %852 = vmatpush1.msra.mxu0 0.0
    %853 = vmatprep.subr.mxu0 0.0
    %854 = vmatpush1.msra.mxu0 0.0
    %855 = vmatprep.subr.mxu0 0.0
    %856 = vmatpush1.msra.mxu0 0.0
    %857 = vmatprep.subr.mxu0 0.0
    %858 = vmatpush1.msra.mxu0 0.0
    %859 = vmatprep.subr.mxu0 0.0
    %860 = vmatpush1.msra.mxu0 0.0
    %861 = vmatprep.subr.mxu0 0.0
    %862 = vmatpush1.msra.mxu0 0.0
    %863 = vmatprep.subr.mxu0 0.0
    %864 = vmatpush1.msra.mxu0 0.0
    %865 = vmatprep.subr.mxu0 0.0
    %866 = vmatpush1.msra.mxu0 0.0
    %867 = vmatprep.subr.mxu0 0.0
    %868 = vmatpush1.msra.mxu0 0.0
    %869 = vmatprep.subr.mxu0 0.0
    %870 = vmatpush1.msra.mxu0 0.0
    %871 = vmatprep.subr.mxu0 0.0
    %872 = vmatpush1.msra.mxu0 0.0
    %873 = vmatprep.subr.mxu0 0.0
    %874 = vmatpush1.msra.mxu0 0.0
    %875 = vmatprep.subr.mxu0 0.0
    %876 = vmatpush1.msra.mxu0 0.0
    %877 = vmatprep.subr.mxu0 0.0
    %878 = vmatpush1.msra.mxu0 0.0
    %879 = vmatprep.mubr.f32.mxu0 0.0
    %880 = vmatmul.mubr.f32.gmra.mrb[0].mxu0 %v813
    %v881 = vpop.f32.mrb[0].mxu0
    %v882 = vadd.f32 0.0, %v881
    %v883 = vpop.f32.mrb[0].mxu0
    %884 = vdwg.mxu0
    %v885 = vadd.f32 %v812, %v882
    %v886 = vxor.u32 %v885, 2147483648
    %v887 = vmul.f32 %v886, 1.442695
    %v888 = vpow.pop %v887
    %v889 = vadd.f32 %v888, 1.0
    %v890 = vrcp.pop %v889
    %v891 = vmul.f32 1.0, %v890
    %v892 = vtanh.pop %v885
    %v893 = vmul.f32 %v891, %v798
    %895 = vrot.lane.b32.xlu0 %v892, 32
    %v896 = vpop.permute.xlu0 %895
    %v898 = vmul.f32 %v891, %v896
    %900 = vrot.lane.b32.xlu0 %v898, 32
    %v901 = vpop.permute.xlu0 %900
    %v903 = vadd.f32 %v893, %v901
    %v904 = vtanh.pop %v903
    %906 = vrot.lane.b32.xlu0 %v904, 32
    %v907 = vpop.permute.xlu0 %906
    %v909 = vmul.f32 %v891, %v907
    %911 = vrot.lane.b32.xlu0 %v909, 64
    %v912 = vpop.permute.xlu0 %911
    %s914 = scalar_lea.vmem [#allocation10], 56
    %915 = vst.msk [vmem:[%s914] sm:$0xff] %vm73, %v912
    %916 = vst.msk [vmem:[#allocation2] sm:$0xff] %vm73, %v912
    %918 = vrot.lane.b32.xlu0 %v903, 96
    %v919 = vpop.permute.xlu0 %918
    %921 = vst.msk [vmem:[#allocation3] sm:$0xff] %vm73, %v919
    // Predicated region
    $region34: #{tpu_custom_call.1} parent=1 // pred_check
      _
    $region35: #{tpu_custom_call.1} parent=1 // pred_check_branch
      %923 = sbr.rel (0) target = $region37
    $region36: #{tpu_custom_call.1} parent=1 // pred_region
      %s925 = ssub.s32 1024, 1024
      %926 = vsyncadd [#allocation6], %s925
      %s927 = sshll.u32 [#allocation10], 4
      %s928 = int_to_ptr.vmem [resolvable:$true] %s927
      %933 = dma.vmem_to_hbm [thread:$0]  %s928, 1024, %s4, [#allocation6], 128, 128, 8
    $region37: #{tpu_custom_call.1} parent=1 // pred_fallthru
      _
    // Predicated region
    $region38: #{tpu_custom_call.1} parent=1 // pred_check
      _
    $region39: #{tpu_custom_call.1} parent=1 // pred_check_branch
      %935 = sbr.rel (0) target = $region41
    $region40: #{tpu_custom_call.1} parent=1 // pred_region
      %936 = dma.done [#allocation6], 1024
    $region41: #{tpu_custom_call.1} parent=1 // pred_fallthru
      _
    %937 = vsyncpa [#allocation5], 1
    %938 = vsyncpa [#allocation8], 1
    %939 = vsyncpa [#allocation6], 1

</llo_original>
